<compile_context>
chip_gen: v7x
topology: tpu7x:2x2x1
jax: 0.10.0
libtpu: 0.0.40
codegen_flags: <defaults>
</compile_context>

<pallas_src>
import functools
import math

import jax
import jax.numpy as jnp
from jax import lax
from jax.experimental import pallas as pl
from jax.experimental.pallas import tpu as pltpu


def _round_up(n: int, m: int) -> int:
    return ((n + m - 1) // m) * m


def _choose_tile_t(t: int, d: int, itemsize: int,
                   max_tile: int = 2048,
                   per_buffer_budget: int = 8 << 20) -> int:
    """Largest lane-aligned token tile whose x-slab stays under a per-buffer budget."""
    by_budget = (per_buffer_budget // max(1, d * itemsize)) // 128 * 128
    tile = max(128, min(max_tile, by_budget))
    tile = min(tile, _round_up(max(t, 1), 128))
    return tile


def _gating_kernel(x_ref, w_ref, gauss_ref, w_out_ref, loss_ref, imp_ref,
                   *, top_k: int, util_factor: float, num_experts: int,
                   t_valid: int, mask_padding: bool):
    E = num_experts

    # --- fused projection: one matmul, no in-kernel weight transpose ---------------
    x = x_ref[...]                        # (T_tile, D)   native dtype
    w = w_ref[...]                        # (2E, D)       native dtype
    # (2E, D) x (T_tile, D) contracting D with D -> (2E, T_tile), f32 accumulation.
    zt = lax.dot_general(w, x, dimension_numbers=(((1,), (1,)), ((), ())),
                         preferred_element_type=jnp.float32)

    logits = zt[:E, :]                    # (E, T_tile)  raw gate logits
    z_noise = zt[E:, :]                   # (E, T_tile)  noise pre-activation

    # numerically-stable softplus, scaled by the standard-normal draws
    softplus = jnp.maximum(z_noise, 0.0) + jnp.log1p(jnp.exp(-jnp.abs(z_noise)))
    logits = logits + softplus * gauss_ref[...].astype(jnp.float32)

    E_, Tt = logits.shape
    neg_inf = jnp.float32(-jnp.inf)
    expert_ids = lax.broadcasted_iota(jnp.int32, (E_, Tt), 0)   # experts on sublanes

    # --- iterative top-k over the expert (sublane) axis ----------------------------
    # First occurrence wins on ties (matches torch.topk); ties have measure zero
    # with Gaussian noise anyway.
    remaining = logits
    selected = jnp.zeros((E_, Tt), dtype=jnp.bool_)
    for _ in range(top_k):
        col_max = jnp.max(remaining, axis=0, keepdims=True)     # (1, Tt)
        cand = jnp.where(remaining == col_max, expert_ids, E_)  # sentinel E
        first = jnp.min(cand, axis=0, keepdims=True)            # (1, Tt)
        onehot = expert_ids == first
        selected = jnp.logical_or(selected, onehot)
        remaining = jnp.where(onehot, neg_inf, remaining)

    masked = jnp.where(selected, logits, neg_inf)

    # --- softmax over experts (sublane reduction, goes to XLU) ---------------------
    m = jnp.max(masked, axis=0, keepdims=True)
    e = jnp.exp(masked - m)
    denom = jnp.sum(e, axis=0, keepdims=True)
    weights = e / denom                                         # (E, Tt), f32

    # --- zero out padded tokens (only when padding actually exists) ----------------
    if mask_padding:
        tok_ids = (pl.program_id(0) * Tt
                   + lax.broadcasted_iota(jnp.int32, (1, Tt), 1))   # (1, Tt)
        weights = jnp.where(tok_ids < t_valid, weights, 0.0)

    w_out_ref[...] = weights.astype(w_out_ref.dtype)            # lane-dense store

    # --- utilization loss: accumulate per-expert importance across tiles -----------
    @pl.when(pl.program_id(0) == 0)
    def _():
        imp_ref[...] = jnp.zeros_like(imp_ref)

    imp_ref[...] += jnp.sum(weights, axis=1, keepdims=True)     # (E, 1)

    @pl.when(pl.program_id(0) == pl.num_programs(0) - 1)
    def _():
        imp = imp_ref[...]                                      # (E, 1)
        mean = jnp.mean(imp, axis=0, keepdims=True)             # (1, 1)
        # population variance (correction=0), matching the PyTorch spec
        var = jnp.mean((imp - mean) ** 2, axis=0, keepdims=True)
        loss_ref[...] = (util_factor * var / (mean * mean)).astype(loss_ref.dtype)


def gating_network(x, wg, wnoise, gauss_noise, *, top_k, utilization_factor):
    """x: (..., D); wg, wnoise: (E, D); gauss_noise: (..., E).

    Returns (weights of shape (..., E), scalar utilization loss)."""
    D = x.shape[-1]
    E = wg.shape[0]
    lead = x.shape[:-1]

    x2d = x.reshape(-1, D)
    T = x2d.shape[0]
    gauss_t = gauss_noise.reshape(-1, E).T.astype(x2d.dtype)    # (E, T) lane-dense

    # token tiling: lane dim must be a multiple of 128; bound the x slab in VMEM
    tile_t = _choose_tile_t(T, D, jnp.dtype(x2d.dtype).itemsize)
    num_tiles = max(1, (T + tile_t - 1) // tile_t)
    t_pad = num_tiles * tile_t
    if t_pad != T:
        x2d = jnp.pad(x2d, ((0, t_pad - T), (0, 0)))
        gauss_t = jnp.pad(gauss_t, ((0, 0), (0, t_pad - T)))

    # fuse the two projections into one stacked weight (no in-kernel transpose)
    w_stacked = jnp.concatenate([wg, wnoise], axis=0).astype(x2d.dtype)   # (2E, D)

    kernel = functools.partial(_gating_kernel,
                               top_k=int(top_k),
                               util_factor=float(utilization_factor),
                               num_experts=E,
                               t_valid=T,
                               mask_padding=(t_pad != T))

    weights_et, loss = pl.pallas_call(
        kernel,
        out_shape=(
            jax.ShapeDtypeStruct((E, t_pad), x2d.dtype),   # weights, (E, T) layout
            jax.ShapeDtypeStruct((1, 1), jnp.float32),     # utilization loss
        ),
        grid_spec=pltpu.PrefetchScalarGridSpec(
            num_scalar_prefetch=0,
            grid=(num_tiles,),
            in_specs=[
                pl.BlockSpec((tile_t, D), lambda i: (i, 0)),   # x tile
                pl.BlockSpec((2 * E, D), lambda i: (0, 0)),    # stacked weights (resident)
                pl.BlockSpec((E, tile_t), lambda i: (0, i)),   # gaussian noise tile
            ],
            out_specs=(
                pl.BlockSpec((E, tile_t), lambda i: (0, i)),   # weights tile
                pl.BlockSpec((1, 1), lambda i: (0, 0)),        # loss (resident)
            ),
            scratch_shapes=[pltpu.VMEM((E, 1), jnp.float32)],  # importance accumulator
        ),
        compiler_params=pltpu.CompilerParams(
            # importance accumulates across the token axis -> must stay serial
            dimension_semantics=("arbitrary",),
        ),
    )(x2d, w_stacked, gauss_t)

    weights = weights_et[:, :T].T.reshape(*lead, E)
    return weights, loss[0, 0]


if __name__ == "__main__":
    # Small shapes consistent with the module: batch=2, seq=8, dim_in=32,
    # num_experts=8, top_k=2.
    batch, seq, dim_in = 2, 8, 32
    num_experts, top_k = 8, 2
    utilization_factor = 0.01

    key = jax.random.PRNGKey(0)
    kx, kg, kn, kr = jax.random.split(key, 4)

    x = jax.random.normal(kx, (batch, seq, dim_in), dtype=jnp.float32)

    # nn.Linear default init: U(-1/sqrt(dim_in), 1/sqrt(dim_in)), weight shape (E, D)
    bound = 1.0 / math.sqrt(dim_in)
    wg = jax.random.uniform(kg, (num_experts, dim_in),
                            minval=-bound, maxval=bound, dtype=jnp.float32)
    wnoise = jax.random.uniform(kn, (num_experts, dim_in),
                                minval=-bound, maxval=bound, dtype=jnp.float32)

    # torch.randn_like equivalent — sampled in plain JAX and fed to the kernel.
    gauss = jax.random.normal(kr, (batch, seq, num_experts), dtype=jnp.float32)

    weights, loss = gating_network(x, wg, wnoise, gauss,
                                   top_k=top_k,
                                   utilization_factor=utilization_factor)
    jax.block_until_ready((weights, loss))

    assert weights.shape == (batch, seq, num_experts)
    assert loss.shape == ()
    # sanity: softmax rows sum to 1, exactly top_k experts active per token,
    # all weights in [0, 1], loss finite and non-negative.
    row_sums = jnp.sum(weights, axis=-1)
    assert jnp.allclose(row_sums, 1.0, atol=1e-5)
    nnz = jnp.sum(weights > 0, axis=-1)
    assert bool(jnp.all(nnz == top_k))
    assert bool(jnp.all((weights >= 0.0) & (weights <= 1.0)))
    assert bool(jnp.isfinite(loss)) and float(loss) >= 0.0

    print("KERNEL_OK")
</pallas_src>

<mosaic_0001>
module attributes {stable_mosaic.version = 11 : i64} {
  func.func @_gating_kernel(%arg0: i32, %arg1: memref<128x32xf32, #tpu.memory_space<vmem>>, %arg2: memref<16x32xf32, #tpu.memory_space<vmem>>, %arg3: memref<8x128xf32, #tpu.memory_space<vmem>>, %arg4: memref<8x128xf32, #tpu.memory_space<vmem>>, %arg5: memref<1x1xf32, #tpu.memory_space<vmem>>, %arg6: memref<8x1xf32, #tpu.memory_space<vmem>>) attributes {dimension_semantics = [#tpu.dimension_semantics<arbitrary>], iteration_bounds = array<i64: 1>, scalar_prefetch = 0 : i64, scratch_operands = 1 : i64, tpu.core_type = #tpu.core_type<tc>, window_params = [{transform_indices = @transform_0, window_bounds = array<i64: 128, 32>}, {pipeline_mode = #tpu.pipeline_mode<synchronous>, transform_indices = @transform_1, window_bounds = array<i64: 16, 32>}, {transform_indices = @transform_2, window_bounds = array<i64: 8, 128>}, {transform_indices = @transform_3, window_bounds = array<i64: 8, 128>}, {pipeline_mode = #tpu.pipeline_mode<synchronous>, transform_indices = @transform_4, window_bounds = array<i64: 1, 1>}]} {
    %c0 = arith.constant 0 : index
    %c0_0 = arith.constant 0 : index
    %0 = vector.load %arg1[%c0, %c0_0] : memref<128x32xf32, #tpu.memory_space<vmem>>, vector<128x32xf32>
    %c0_1 = arith.constant 0 : index
    %c0_2 = arith.constant 0 : index
    %1 = vector.load %arg2[%c0_1, %c0_2] : memref<16x32xf32, #tpu.memory_space<vmem>>, vector<16x32xf32>
    %cst = arith.constant dense<0.000000e+00> : vector<16x128xf32>
    %2 = tpu.matmul %1, %0, %cst {dimension_numbers = #tpu.dot_dimension_numbers<[1], [1], [0], [0], [0, 0, 1, 0], [], []>} : vector<16x32xf32>, vector<128x32xf32>, vector<16x128xf32> -> vector<16x128xf32>
    %3 = vector.extract_strided_slice %2 {offsets = [0, 0], sizes = [8, 128], strides = [1, 1]} : vector<16x128xf32> to vector<8x128xf32>
    %4 = vector.extract_strided_slice %2 {offsets = [8, 0], sizes = [8, 128], strides = [1, 1]} : vector<16x128xf32> to vector<8x128xf32>
    %cst_3 = arith.constant 0.000000e+00 : f32
    %5 = vector.broadcast %cst_3 : f32 to vector<8x128xf32>
    %6 = arith.maximumf %4, %5 : vector<8x128xf32>
    %7 = math.absf %4 : vector<8x128xf32>
    %cst_4 = arith.constant 0.000000e+00 : f32
    %8 = vector.broadcast %cst_4 : f32 to vector<8x128xf32>
    %9 = arith.subf %8, %7 : vector<8x128xf32>
    %10 = math.exp %9 : vector<8x128xf32>
    %11 = math.log1p %10 : vector<8x128xf32>
    %12 = arith.addf %6, %11 : vector<8x128xf32>
    %c0_5 = arith.constant 0 : index
    %c0_6 = arith.constant 0 : index
    %13 = vector.load %arg3[%c0_5, %c0_6] : memref<8x128xf32, #tpu.memory_space<vmem>>, vector<8x128xf32>
    %14 = arith.mulf %12, %13 : vector<8x128xf32>
    %15 = arith.addf %3, %14 : vector<8x128xf32>
    %16 = tpu.iota {dimensions = array<i32: 0>} : vector<8x128xi32>
    %false = arith.constant false
    %17 = vector.broadcast %false : i1 to vector<8x128xi1>
    %cst_7 = arith.constant dense<0xFF800000> : vector<128xf32>
    %18 = vector.multi_reduction <maximumf>, %15, %cst_7 [0] : vector<8x128xf32> to vector<128xf32>
    %19 = vector.shape_cast %18 : vector<128xf32> to vector<1x128xf32>
    %20 = vector.broadcast %19 : vector<1x128xf32> to vector<8x128xf32>
    %21 = arith.cmpf oeq, %15, %20 : vector<8x128xf32>
    %c8_i32 = arith.constant 8 : i32
    %22 = vector.broadcast %c8_i32 : i32 to vector<8x128xi32>
    %23 = arith.select %21, %16, %22 : vector<8x128xi1>, vector<8x128xi32>
    %cst_8 = arith.constant dense<2147483647> : vector<128xi32>
    %24 = vector.multi_reduction <minsi>, %23, %cst_8 [0] : vector<8x128xi32> to vector<128xi32>
    %25 = vector.shape_cast %24 : vector<128xi32> to vector<1x128xi32>
    %26 = vector.broadcast %25 : vector<1x128xi32> to vector<8x128xi32>
    %27 = arith.cmpi eq, %16, %26 : vector<8x128xi32>
    %28 = arith.ori %17, %27 : vector<8x128xi1>
    %cst_9 = arith.constant 0xFF800000 : f32
    %29 = vector.broadcast %cst_9 : f32 to vector<8x128xf32>
    %30 = arith.select %27, %29, %15 : vector<8x128xi1>, vector<8x128xf32>
    %cst_10 = arith.constant dense<0xFF800000> : vector<128xf32>
    %31 = vector.multi_reduction <maximumf>, %30, %cst_10 [0] : vector<8x128xf32> to vector<128xf32>
    %32 = vector.shape_cast %31 : vector<128xf32> to vector<1x128xf32>
    %33 = vector.broadcast %32 : vector<1x128xf32> to vector<8x128xf32>
    %34 = arith.cmpf oeq, %30, %33 : vector<8x128xf32>
    %c8_i32_11 = arith.constant 8 : i32
    %35 = vector.broadcast %c8_i32_11 : i32 to vector<8x128xi32>
    %36 = arith.select %34, %16, %35 : vector<8x128xi1>, vector<8x128xi32>
    %cst_12 = arith.constant dense<2147483647> : vector<128xi32>
    %37 = vector.multi_reduction <minsi>, %36, %cst_12 [0] : vector<8x128xi32> to vector<128xi32>
    %38 = vector.shape_cast %37 : vector<128xi32> to vector<1x128xi32>
    %39 = vector.broadcast %38 : vector<1x128xi32> to vector<8x128xi32>
    %40 = arith.cmpi eq, %16, %39 : vector<8x128xi32>
    %41 = arith.ori %28, %40 : vector<8x128xi1>
    %cst_13 = arith.constant 0xFF800000 : f32
    %42 = vector.broadcast %cst_13 : f32 to vector<8x128xf32>
    %43 = arith.select %41, %15, %42 : vector<8x128xi1>, vector<8x128xf32>
    %cst_14 = arith.constant dense<0xFF800000> : vector<128xf32>
    %44 = vector.multi_reduction <maximumf>, %43, %cst_14 [0] : vector<8x128xf32> to vector<128xf32>
    %45 = vector.shape_cast %44 : vector<128xf32> to vector<1x128xf32>
    %46 = vector.broadcast %45 : vector<1x128xf32> to vector<8x128xf32>
    %47 = arith.subf %43, %46 : vector<8x128xf32>
    %48 = math.exp %47 : vector<8x128xf32>
    %cst_15 = arith.constant dense<0.000000e+00> : vector<128xf32>
    %49 = vector.multi_reduction <add>, %48, %cst_15 [0] : vector<8x128xf32> to vector<128xf32>
    %50 = vector.shape_cast %49 : vector<128xf32> to vector<1x128xf32>
    %51 = vector.broadcast %50 : vector<1x128xf32> to vector<8x128xf32>
    %52 = arith.divf %48, %51 : vector<8x128xf32>
    %c128_i32 = arith.constant 128 : i32
    %53 = arith.muli %arg0, %c128_i32 : i32
    %54 = tpu.iota {dimensions = array<i32: 1>} : vector<1x128xi32>
    %55 = vector.broadcast %53 : i32 to vector<1x128xi32>
    %56 = arith.addi %55, %54 : vector<1x128xi32>
    %c16_i32 = arith.constant 16 : i32
    %57 = vector.broadcast %c16_i32 : i32 to vector<1x128xi32>
    %58 = arith.cmpi slt, %56, %57 : vector<1x128xi32>
    %cst_16 = arith.constant 0.000000e+00 : f32
    %59 = vector.shape_cast %58 : vector<1x128xi1> to vector<1x128xi1>
    %60 = vector.broadcast %59 : vector<1x128xi1> to vector<8x128xi1>
    %61 = vector.broadcast %cst_16 : f32 to vector<8x128xf32>
    %62 = arith.select %60, %52, %61 : vector<8x128xi1>, vector<8x128xf32>
    %c0_17 = arith.constant 0 : index
    %c0_18 = arith.constant 0 : index
    %63 = vector.load %arg4[%c0_17, %c0_18] : memref<8x128xf32, #tpu.memory_space<vmem>>, vector<8x128xf32>
    tpu.vector_store %arg4[%c0_17, %c0_18], %62 {strides = array<i32>} : memref<8x128xf32, #tpu.memory_space<vmem>>, vector<8x128xf32>,
    %c0_i32 = arith.constant 0 : i32
    %64 = arith.cmpi eq, %arg0, %c0_i32 : i32
    %65 = arith.extui %64 : i1 to i32
    %c0_i32_19 = arith.constant 0 : i32
    %66 = arith.cmpi ne, %65, %c0_i32_19 : i32
    scf.if %66 {
      %cst_27 = arith.constant 0.000000e+00 : f32
      %75 = vector.broadcast %cst_27 : f32 to vector<8x1xf32>
      %c0_28 = arith.constant 0 : index
      %c0_29 = arith.constant 0 : index
      %76 = vector.load %arg6[%c0_28, %c0_29] : memref<8x1xf32, #tpu.memory_space<vmem>>, vector<8x1xf32>
      tpu.vector_store %arg6[%c0_28, %c0_29], %75 {strides = array<i32>} : memref<8x1xf32, #tpu.memory_space<vmem>>, vector<8x1xf32>,
    } else {
    }
    %c0_20 = arith.constant 0 : index
    %c0_21 = arith.constant 0 : index
    %67 = vector.load %arg6[%c0_20, %c0_21] : memref<8x1xf32, #tpu.memory_space<vmem>>, vector<8x1xf32>
    %cst_22 = arith.constant dense<0.000000e+00> : vector<8xf32>
    %68 = vector.multi_reduction <add>, %62, %cst_22 [1] : vector<8x128xf32> to vector<8xf32>
    %69 = vector.shape_cast %68 : vector<8xf32> to vector<8x1xf32>
    %70 = arith.addf %67, %69 : vector<8x1xf32>
    %c0_23 = arith.constant 0 : index
    %c0_24 = arith.constant 0 : index
    %71 = vector.load %arg6[%c0_23, %c0_24] : memref<8x1xf32, #tpu.memory_space<vmem>>, vector<8x1xf32>
    tpu.vector_store %arg6[%c0_23, %c0_24], %70 {strides = array<i32>} : memref<8x1xf32, #tpu.memory_space<vmem>>, vector<8x1xf32>,
    %c0_i32_25 = arith.constant 0 : i32
    %72 = arith.cmpi eq, %arg0, %c0_i32_25 : i32
    %73 = arith.extui %72 : i1 to i32
    %c0_i32_26 = arith.constant 0 : i32
    %74 = arith.cmpi ne, %73, %c0_i32_26 : i32
    scf.if %74 {
      %c0_27 = arith.constant 0 : index
      %c0_28 = arith.constant 0 : index
      %75 = vector.load %arg6[%c0_27, %c0_28] : memref<8x1xf32, #tpu.memory_space<vmem>>, vector<8x1xf32>
      %cst_29 = arith.constant dense<0.000000e+00> : vector<1xf32>
      %76 = vector.multi_reduction <add>, %75, %cst_29 [0] : vector<8x1xf32> to vector<1xf32>
      %77 = vector.shape_cast %76 : vector<1xf32> to vector<1x1xf32>
      %cst_30 = arith.constant 8.000000e+00 : f32
      %78 = vector.broadcast %cst_30 : f32 to vector<1x1xf32>
      %79 = arith.divf %77, %78 : vector<1x1xf32>
      %80 = vector.broadcast %79 : vector<1x1xf32> to vector<8x1xf32>
      %81 = arith.subf %75, %80 : vector<8x1xf32>
      %82 = arith.mulf %81, %81 : vector<8x1xf32>
      %cst_31 = arith.constant dense<0.000000e+00> : vector<1xf32>
      %83 = vector.multi_reduction <add>, %82, %cst_31 [0] : vector<8x1xf32> to vector<1xf32>
      %84 = vector.shape_cast %83 : vector<1xf32> to vector<1x1xf32>
      %cst_32 = arith.constant 8.000000e+00 : f32
      %85 = vector.broadcast %cst_32 : f32 to vector<1x1xf32>
      %86 = arith.divf %84, %85 : vector<1x1xf32>
      %cst_33 = arith.constant 0.00999999977 : f32
      %87 = vector.broadcast %cst_33 : f32 to vector<1x1xf32>
      %88 = arith.mulf %87, %86 : vector<1x1xf32>
      %89 = arith.mulf %79, %79 : vector<1x1xf32>
      %90 = arith.divf %88, %89 : vector<1x1xf32>
      %c0_34 = arith.constant 0 : index
      %c0_35 = arith.constant 0 : index
      %91 = vector.load %arg5[%c0_34, %c0_35] : memref<1x1xf32, #tpu.memory_space<vmem>>, vector<1x1xf32>
      tpu.vector_store %arg5[%c0_34, %c0_35], %90 {strides = array<i32>} : memref<1x1xf32, #tpu.memory_space<vmem>>, vector<1x1xf32>,
    } else {
    }
    return
  }
  func.func @transform_0(%arg0: i32) -> (i32, i32) {
    %c0_i32 = arith.constant 0 : i32
    %c0_i32_0 = arith.constant 0 : i32
    return %arg0, %c0_i32 : i32, i32
  }
  func.func @transform_1(%arg0: i32) -> (i32, i32) {
    %c0_i32 = arith.constant 0 : i32
    %c0_i32_0 = arith.constant 0 : i32
    %c0_i32_1 = arith.constant 0 : i32
    return %c0_i32, %c0_i32_0 : i32, i32
  }
  func.func @transform_2(%arg0: i32) -> (i32, i32) {
    %c0_i32 = arith.constant 0 : i32
    %c0_i32_0 = arith.constant 0 : i32
    return %c0_i32, %arg0 : i32, i32
  }
  func.func @transform_3(%arg0: i32) -> (i32, i32) {
    %c0_i32 = arith.constant 0 : i32
    %c0_i32_0 = arith.constant 0 : i32
    return %c0_i32, %arg0 : i32, i32
  }
  func.func @transform_4(%arg0: i32) -> (i32, i32) {
    %c0_i32 = arith.constant 0 : i32
    %c0_i32_0 = arith.constant 0 : i32
    %c0_i32_1 = arith.constant 0 : i32
    return %c0_i32, %c0_i32_0 : i32, i32
  }
}

</mosaic_0001>

<llo_original>
// kernel: tpu_custom_call.1
$region0: #{tpu_custom_call.1}
  #allocation0 [shape = 'u32[]', space=smem, size = 0x4, offset = 0x4, fixed_abs, tag = 'smem constant byte address 0x4 - core index']
  #allocation1 [shape = 'u32[144,128]{1,0:T(1,128)}', space=vmem, size = 0x12000, scoped, tag = 'internal scratch']
  #allocation2 [shape = 'f32[8,1]{1,0:T(8,128)}', space=vmem, size = 0x1000, scoped, tag = 'scratch operand']
  %s0 = inlined_call_operand.vmem [shape: f32[128,32], index: 0, kind: input, shape index: {}]
  %s1 = inlined_call_operand.vmem [shape: f32[16,32], index: 1, kind: input, shape index: {}]
  %s2 = inlined_call_operand.vmem [shape: f32[8,128], index: 2, kind: input, shape index: {}]
  %s3 = inlined_call_operand.hbm [shape: f32[8,128], index: 3, kind: output, shape index: {0}]
  %s4 = inlined_call_operand.hbm [shape: f32[1,1], index: 4, kind: output, shape index: {1}]
  %5 = xla_tuple %s3, %s4
  %s6 = sld [smem:[#allocation0]]
  $region38: #{tpu_custom_call.1} parent=0
    _
  %s8 = ssub.s32 1, %s6
  %s9 = scalar_select 0, %s8, %s6
  $region1: #{tpu_custom_call.1} parent=0
    #allocation3 [shape = 'u8[4096]{0}', space=vmem, size = 0x1000, scoped, tag = 'output window, operand 0, single buffered']
    #allocation4 [shape = 's32[1]{0}', space=sflag, size = 0x4, scoped, tag = 'scoped memory for tpu_custom_call.1']
    #allocation5 [shape = 'u8[512]{0}', space=vmem, size = 0x400, scoped, tag = 'output window, operand 1, single buffered']
    #allocation6 [shape = 's32[1]{0}', space=sflag, size = 0x4, scoped, tag = 'scoped memory for tpu_custom_call.1']
    %10 = vsyncpa [#allocation4], 0
    %11 = vsyncpa [#allocation6], 0
    // Predicated region
    $region2: #{tpu_custom_call.1} parent=1 // pred_check
      _
    $region3: #{tpu_custom_call.1} parent=1 // pred_check_branch
      %13 = sbr.rel (0) target = $region5
    $region4: #{tpu_custom_call.1} parent=1 // pred_region
      _
    $region5: #{tpu_custom_call.1} parent=1 // pred_fallthru
      _
    // Predicated region
    $region6: #{tpu_custom_call.1} parent=1 // pred_check
      _
    $region7: #{tpu_custom_call.1} parent=1 // pred_check_branch
      %15 = sbr.rel (0) target = $region9
    $region8: #{tpu_custom_call.1} parent=1 // pred_region
      _
    $region9: #{tpu_custom_call.1} parent=1 // pred_fallthru
      _
    // Predicated region
    $region10: #{tpu_custom_call.1} parent=1 // pred_check
      _
    $region11: #{tpu_custom_call.1} parent=1 // pred_check_branch
      %17 = sbr.rel (0) target = $region13
    $region12: #{tpu_custom_call.1} parent=1 // pred_region
      _
    $region13: #{tpu_custom_call.1} parent=1 // pred_fallthru
      _
    %v18 = vld [vmem:[%s0] sm:$0xff]
    %v19 = vld [vmem:[%s0 + $0x8] sm:$0xff]
    %v20 = vld [vmem:[%s0 + $0x10] sm:$0xff]
    %v21 = vld [vmem:[%s0 + $0x18] sm:$0xff]
    %v22 = vld [vmem:[%s0 + $0x20] sm:$0xff]
    %v23 = vld [vmem:[%s0 + $0x28] sm:$0xff]
    %v24 = vld [vmem:[%s0 + $0x30] sm:$0xff]
    %v25 = vld [vmem:[%s0 + $0x38] sm:$0xff]
    %v26 = vld [vmem:[%s0 + $0x40] sm:$0xff]
    %v27 = vld [vmem:[%s0 + $0x48] sm:$0xff]
    %v28 = vld [vmem:[%s0 + $0x50] sm:$0xff]
    %v29 = vld [vmem:[%s0 + $0x58] sm:$0xff]
    %v30 = vld [vmem:[%s0 + $0x60] sm:$0xff]
    %v31 = vld [vmem:[%s0 + $0x68] sm:$0xff]
    %v32 = vld [vmem:[%s0 + $0x70] sm:$0xff]
    %v33 = vld [vmem:[%s0 + $0x78] sm:$0xff]
    %v34 = vld [vmem:[%s1] sm:$0xff]
    %v35 = vld [vmem:[%s1 + $0x8] sm:$0xff]
    %vm36 = vcmask 261120
    %v38 = vsel %vm36, %v34, 0
    %v41 = vsel %vm36, %v35, 0
    %v44 = vsel %vm36, %v18, 0
    %v47 = vsel %vm36, %v19, 0
    %v50 = vsel %vm36, %v20, 0
    %v53 = vsel %vm36, %v21, 0
    %v56 = vsel %vm36, %v22, 0
    %v59 = vsel %vm36, %v23, 0
    %v62 = vsel %vm36, %v24, 0
    %v65 = vsel %vm36, %v25, 0
    %v68 = vsel %vm36, %v26, 0
    %v71 = vsel %vm36, %v27, 0
    %v74 = vsel %vm36, %v28, 0
    %v77 = vsel %vm36, %v29, 0
    %v80 = vsel %vm36, %v30, 0
    %v83 = vsel %vm36, %v31, 0
    %v86 = vsel %vm36, %v32, 0
    %v89 = vsel %vm36, %v33, 0
    %91 = vmatprep.subr.mxu0 0.0
    %92 = vmatpush1.xpose.msra.mxu0 %v44
    %93 = vmatprep.subr.mxu0 0.0
    %94 = vmatpush1.xpose.msra.mxu0 %v47
    %95 = vmatprep.subr.mxu0 0.0
    %96 = vmatpush1.xpose.msra.mxu0 %v50
    %97 = vmatprep.subr.mxu0 0.0
    %98 = vmatpush1.xpose.msra.mxu0 %v53
    %99 = vmatprep.subr.mxu0 0.0
    %100 = vmatpush1.xpose.msra.mxu0 %v56
    %101 = vmatprep.subr.mxu0 0.0
    %102 = vmatpush1.xpose.msra.mxu0 %v59
    %103 = vmatprep.subr.mxu0 0.0
    %104 = vmatpush1.xpose.msra.mxu0 %v62
    %105 = vmatprep.subr.mxu0 0.0
    %106 = vmatpush1.xpose.msra.mxu0 %v65
    %107 = vmatprep.subr.mxu0 0.0
    %108 = vmatpush1.xpose.msra.mxu0 %v68
    %109 = vmatprep.subr.mxu0 0.0
    %110 = vmatpush1.xpose.msra.mxu0 %v71
    %111 = vmatprep.subr.mxu0 0.0
    %112 = vmatpush1.xpose.msra.mxu0 %v74
    %113 = vmatprep.subr.mxu0 0.0
    %114 = vmatpush1.xpose.msra.mxu0 %v77
    %115 = vmatprep.subr.mxu0 0.0
    %116 = vmatpush1.xpose.msra.mxu0 %v80
    %117 = vmatprep.subr.mxu0 0.0
    %118 = vmatpush1.xpose.msra.mxu0 %v83
    %119 = vmatprep.subr.mxu0 0.0
    %120 = vmatpush1.xpose.msra.mxu0 %v86
    %121 = vmatprep.subr.mxu0 0.0
    %122 = vmatpush1.xpose.msra.mxu0 %v89
    %123 = vmatprep.subr.mxu0 0.0
    %124 = vmatpush1.xpose.msra.mxu0 0.0
    %125 = vmatprep.subr.mxu0 0.0
    %126 = vmatpush1.xpose.msra.mxu0 0.0
    %127 = vmatprep.subr.mxu0 0.0
    %128 = vmatpush1.xpose.msra.mxu0 0.0
    %129 = vmatprep.subr.mxu0 0.0
    %130 = vmatpush1.xpose.msra.mxu0 0.0
    %131 = vmatprep.subr.mxu0 0.0
    %132 = vmatpush1.xpose.msra.mxu0 0.0
    %133 = vmatprep.subr.mxu0 0.0
    %134 = vmatpush1.xpose.msra.mxu0 0.0
    %135 = vmatprep.subr.mxu0 0.0
    %136 = vmatpush1.xpose.msra.mxu0 0.0
    %137 = vmatprep.subr.mxu0 0.0
    %138 = vmatpush1.xpose.msra.mxu0 0.0
    %139 = vmatprep.subr.mxu0 0.0
    %140 = vmatpush1.xpose.msra.mxu0 0.0
    %141 = vmatprep.subr.mxu0 0.0
    %142 = vmatpush1.xpose.msra.mxu0 0.0
    %143 = vmatprep.subr.mxu0 0.0
    %144 = vmatpush1.xpose.msra.mxu0 0.0
    %145 = vmatprep.subr.mxu0 0.0
    %146 = vmatpush1.xpose.msra.mxu0 0.0
    %147 = vmatprep.subr.mxu0 0.0
    %148 = vmatpush1.xpose.msra.mxu0 0.0
    %149 = vmatprep.subr.mxu0 0.0
    %150 = vmatpush1.xpose.msra.mxu0 0.0
    %151 = vmatprep.subr.mxu0 0.0
    %152 = vmatpush1.xpose.msra.mxu0 0.0
    %153 = vmatprep.subr.mxu0 0.0
    %154 = vmatpush1.xpose.msra.mxu0 0.0
    %155 = vmatprep.mubr.f32.mxu0 0.0
    %156 = vmatmul.mubr.f32.gmra.mrb[0].mxu0 %v38
    %v157 = vpop.f32.mrb[0].mxu0
    %v158 = vadd.f32 0.0, %v157
    %v159 = vpop.f32.mrb[0].mxu0
    %160 = vmatprep.mubr.f32.mxu0 0.0
    %161 = vmatmul.mubr.f32.gmra.mrb[0].mxu0 %v41
    %v162 = vpop.f32.mrb[0].mxu0
    %v163 = vadd.f32 0.0, %v162
    %v164 = vpop.f32.mrb[0].mxu0
    %165 = vdwg.mxu0
    %v166 = vmax.f32 %v163, 0.0
    %v167 = vand.u32 2147483647, %v163
    %v168 = vsub.f32 0.0, %v167
    %v169 = vmul.f32 %v168, 1.442695
    %v170 = vpow.pop %v169
    %v171 = vadd.f32 %v170, 1.0
    %v172 = vlog2.pop %v171
    %v173 = vmul.f32 %v172, 0.6931472
    %v174 = vmul.f32 -0.5, %v170
    %v175 = vadd.f32 %v174, 1.0
    %v176 = vmul.f32 %v175, %v170
    %v177 = vand.u32 2147483647, %v170
    %vm178 = vcmp.lt.f32.partialorder %v177, 0.0004427343
    %v179 = vsel %vm178, %v176, %v173
    %v180 = vadd.f32 %v166, %v179
    %v181 = vld [vmem:[%s2] sm:$0xff]
    %v182 = vmul.f32 %v180, %v181
    %v183 = vadd.f32 %v158, %v182
    %v184 = vlaneseq
    %v185 = vshrl.u32 %v184, 7
    %v186 = vrot.slane %v183, 4
    %v187 = vmax.f32 %v183, %v186
    %v188 = vrot.slane %v187, 2
    %v189 = vmax.f32 %v187, %v188
    %v190 = vrot.slane %v189, 1
    %v191 = vmax.f32 %v189, %v190
    %vm192 = vcmp.eq.f32.partialorder %v183, %v191
    %v193 = vsel %vm192, %v185, 8
    %v194 = vrot.slane %v193, 4
    %vm195 = vcmp.lt.s32.totalorder %v193, %v194
    %v196 = vsel %vm195, %v193, %v194
    %v197 = vrot.slane %v196, 2
    %vm198 = vcmp.lt.s32.totalorder %v196, %v197
    %v199 = vsel %vm198, %v196, %v197
    %v200 = vrot.slane %v199, 1
    %vm201 = vcmp.lt.s32.totalorder %v199, %v200
    %v202 = vsel %vm201, %v199, %v200
    %vm203 = vcmp.eq.s32.totalorder %v185, %v202
    %v204 = vsel %vm203, -inf, %v183
    %v205 = vrot.slane %v204, 4
    %v206 = vmax.f32 %v204, %v205
    %v207 = vrot.slane %v206, 2
    %v208 = vmax.f32 %v206, %v207
    %v209 = vrot.slane %v208, 1
    %v210 = vmax.f32 %v208, %v209
    %vm211 = vcmp.eq.f32.partialorder %v204, %v210
    %v212 = vsel %vm211, %v185, 8
    %v213 = vrot.slane %v212, 4
    %vm214 = vcmp.lt.s32.totalorder %v212, %v213
    %v215 = vsel %vm214, %v212, %v213
    %v216 = vrot.slane %v215, 2
    %vm217 = vcmp.lt.s32.totalorder %v215, %v216
    %v218 = vsel %vm217, %v215, %v216
    %v219 = vrot.slane %v218, 1
    %vm220 = vcmp.lt.s32.totalorder %v218, %v219
    %v221 = vsel %vm220, %v218, %v219
    %vm222 = vcmp.eq.s32.totalorder %v185, %v221
    %vm223 = vmor %vm203, %vm222
    %v224 = vsel %vm223, %v183, -inf
    %v225 = vrot.slane %v224, 4
    %v226 = vmax.f32 %v224, %v225
    %v227 = vrot.slane %v226, 2
    %v228 = vmax.f32 %v226, %v227
    %v229 = vrot.slane %v228, 1
    %v230 = vmax.f32 %v228, %v229
    %v231 = vsub.f32 %v224, %v230
    %v232 = vmul.f32 %v231, 1.442695
    %v233 = vpow.pop %v232
    %v234 = vrot.slane %v233, 4
    %v235 = vadd.f32 %v233, %v234
    %v236 = vrot.slane %v235, 2
    %v237 = vadd.f32 %v235, %v236
    %v238 = vrot.slane %v237, 1
    %v239 = vadd.f32 %v237, %v238
    %v240 = vrcp.pop %v239
    %v241 = vmul.f32 %v233, %v240
    %s242 = smul.u32 0, 128
    %v243 = vlaneseq
    %v244 = vand.u32 %v243, 127
    %v245 = vstv %s242
    %v246 = vadd.s32 %v245, %v244
    %vm247 = vcmp.lt.s32.totalorder %v246, 16
    %v248 = vsel %vm247, 1, 0
    %vm249 = vcmp.eq.s32.totalorder %v248, 1
    %v250 = vsel %vm249, %v241, 0.0
    %251 = vst [vmem:[#allocation3] sm:$0xff] %v250
    %p252 = scmp.eq.s32.totalorder 0, 0
    // Predicated region
    $region14: #{tpu_custom_call.1} parent=1 // pred_check
      %p253 = pneg %p252
    $region15: #{tpu_custom_call.1} parent=1 // pred_check_branch
      %255 = sbr.rel (%p253) target = $region17
    $region16: #{tpu_custom_call.1} parent=1 // pred_region
      %vm256 = vcmask 7168
      %257 = vst.msk [vmem:[#allocation2] sm:$0xff] %vm256, 0.0
    $region17: #{tpu_custom_call.1} parent=1 // pred_fallthru
      _
    %v258 = vld [vmem:[#allocation2] sm:$0xff]
    %259 = vadd.xlane.f32.xlu0 %v250
    %v260 = vpop.xlane.xlu0 %259
    %v261 = vadd.f32 %v258, %v260
    %vm262 = vcmask 7168
    %263 = vst.msk [vmem:[#allocation2] sm:$0xff] %vm262, %v261
    // Predicated region
    $region18: #{tpu_custom_call.1} parent=1 // pred_check
      %p264 = pneg %p252
    $region19: #{tpu_custom_call.1} parent=1 // pred_check_branch
      %266 = sbr.rel (%p264) target = $region21
    $region20: #{tpu_custom_call.1} parent=1 // pred_region
      %v267 = vld [vmem:[#allocation2] sm:$0xff]
      %v268 = vsel %vm262, %v267, 0.0
      %v269 = vrot.slane %v268, 4
      %v270 = vadd.f32 %v268, %v269
      %v271 = vrot.slane %v270, 2
      %v272 = vadd.f32 %v270, %v271
      %v273 = vrot.slane %v272, 1
      %v274 = vadd.f32 %v272, %v273
      %v275 = vrcp.pop 8.0
      %v276 = vmul.f32 %v274, %v275
      %v277 = vsub.f32 %v267, %v276
      %v278 = vmul.f32 %v277, %v277
      %v279 = vsel %vm262, %v278, 0.0
      %v280 = vrot.slane %v279, 4
      %v281 = vadd.f32 %v279, %v280
      %v282 = vrot.slane %v281, 2
      %v283 = vadd.f32 %v281, %v282
      %v284 = vrot.slane %v283, 1
      %v285 = vadd.f32 %v283, %v284
      %v286 = vmul.f32 %v285, %v275
      %v287 = vmul.f32 %v286, 0.01
      %v288 = vmul.f32 %v276, %v276
      %v289 = vrcp.pop %v288
      %v290 = vmul.f32 %v287, %v289
      %vm291 = vcmask 0
      %292 = vst.msk [vmem:[#allocation5] sm:$0x1] %vm291, %v290
    $region21: #{tpu_custom_call.1} parent=1 // pred_fallthru
      _
    // Predicated region
    $region22: #{tpu_custom_call.1} parent=1 // pred_check
      _
    $region23: #{tpu_custom_call.1} parent=1 // pred_check_branch
      %294 = sbr.rel (0) target = $region25
    $region24: #{tpu_custom_call.1} parent=1 // pred_region
      %s296 = ssub.s32 128, 128
      %297 = vsyncadd [#allocation4], %s296
      %s299 = sshll.u32 [#allocation3], 4
      %s300 = int_to_ptr.vmem [resolvable:$true] %s299
      %302 = dma.vmem_to_hbm [thread:$0]  %s300, 128, %s3, [#allocation4]
    $region25: #{tpu_custom_call.1} parent=1 // pred_fallthru
      _
    // Predicated region
    $region26: #{tpu_custom_call.1} parent=1 // pred_check
      _
    $region27: #{tpu_custom_call.1} parent=1 // pred_check_branch
      %304 = sbr.rel (0) target = $region29
    $region28: #{tpu_custom_call.1} parent=1 // pred_region
      %s306 = ssub.s32 16, 16
      %307 = vsyncadd [#allocation6], %s306
      %s309 = sshll.u32 [#allocation5], 4
      %s310 = int_to_ptr.vmem [resolvable:$true] %s309
      %312 = dma.vmem_to_hbm [thread:$0]  %s310, 16, %s4, [#allocation6]
    $region29: #{tpu_custom_call.1} parent=1 // pred_fallthru
      _
    // Predicated region
    $region30: #{tpu_custom_call.1} parent=1 // pred_check
      _
    $region31: #{tpu_custom_call.1} parent=1 // pred_check_branch
      %314 = sbr.rel (0) target = $region33
    $region32: #{tpu_custom_call.1} parent=1 // pred_region
      %315 = dma.done [#allocation4], 128
    $region33: #{tpu_custom_call.1} parent=1 // pred_fallthru
      _
    // Predicated region
    $region34: #{tpu_custom_call.1} parent=1 // pred_check
      _
    $region35: #{tpu_custom_call.1} parent=1 // pred_check_branch
      %317 = sbr.rel (0) target = $region37
    $region36: #{tpu_custom_call.1} parent=1 // pred_region
      %318 = dma.done [#allocation6], 16
    $region37: #{tpu_custom_call.1} parent=1 // pred_fallthru
      _
    %319 = vsyncpa [#allocation4], 1
    %320 = vsyncpa [#allocation6], 1

</llo_original>
